<compile_context>
chip_gen: v5e
topology: v5e:2x2
jax: 0.10.0
libtpu: 0.0.40
codegen_flags: <defaults>
</compile_context>

<pallas_src>
import jax
import jax.numpy as jnp
from jax.experimental import pallas as pl
from jax.experimental.pallas import tpu as pltpu

# ---------------- problem sizes (small, consistent with the module) -------------
INPUT_SIZE = 7                       # Conv1d in_channels
C1 = (INPUT_SIZE - 3) * 8            # 32 : conv1 out_channels == linear1 in_features
L = C1                               # sequence length must equal linear1 in_features
K = 4                                # conv1 kernel size
HID = 128                            # linear1 out_features
N = 2                                # batch
C_IN_PAD = 8                         # conv1 input channels padded 7 -> 8 (sublane aligned)
# PyTorch padding='same' with even kernel: total pad = K-1 = 3, left = 1, right = 2
PAD_L, PAD_R = (K - 1) // 2, (K - 1) - (K - 1) // 2
LP = L + K - 1                       # padded length (35)
KP = K * C_IN_PAD                    # im2col contraction: 4 taps * 8 chans = 32 (8-aligned)

# Packed-weight buffer layout: (W_ROWS, 128) f32, biases merged in.
R_L1 = 0        # rows   0..31 : linear1.weight.T                  (32, 128), all lanes
R_L2 = 32       # rows  32..63 : linear2.weight.T block j          (32, 32) at lanes [32j, 32j+32)
R_MIX = 64      # rows  64..95 : lanes 0..31  conv1 im2col weight  (32, 32)
                #                lanes 32..38 linear3.weight.T     (32, 7)
                #                lane  40     conv1.bias column    (32, 1)
R_CV2 = 96      # rows  96..102: conv2 1x1 weight.T, lane-dense    (7, 128), lanes 7.. are zero
R_B = 104       # rows 104..107: bias rows: bl1(128) / bl2(32) / bl3(7) / b2(7, lanes 7.. zero)
W_ROWS = 112    # padded to a multiple of 8
LANE_L3 = 32
LANE_B1 = 40


def _make_kernel(n_batch):
    """Build the single-invocation kernel for a static batch size."""

    def kernel(xt_ref,   # (n_batch, KP, L)        im2col'd input (built in wrapper)
               w_ref,    # (W_ROWS, 128)           packed weights + biases
               o_ref,    # (n_batch*C1, 128)       lane-dense output slab
               h0_ref):  # (n_batch*C1, L) scratch conv1 activation accumulator
        # ---- conv1 via im2col: one aligned (C1,KP)x(KP,L) dot per batch element,
        #      written straight into sublane-aligned rows of the scratch (no concat).
        w1m = w_ref[R_MIX:R_MIX + C1, 0:KP]                       # (32, 32)
        b1c = w_ref[R_MIX:R_MIX + C1, LANE_B1:LANE_B1 + 1]        # (32, 1) -> lane broadcast
        for n in range(n_batch):                                  # static unroll (n_batch=2)
            h0_ref[n * C1:(n + 1) * C1, :] = (
                jnp.dot(w1m, xt_ref[n], preferred_element_type=jnp.float32) + b1c)
        h = h0_ref[...]                                           # (n*C1, L) = (64, 32)

        # ---- linear1 + relu (acts on last axis) ----
        h = jnp.dot(h, w_ref[R_L1:R_L1 + L, :],
                    preferred_element_type=jnp.float32) + w_ref[R_B:R_B + 1, :]
        h = jnp.maximum(h, 0.0)                                   # (64, 128)

        # ---- linear2 + relu : wl2.T stored as 4 lane-adjacent (32,32) column blocks ----
        acc = jnp.dot(h[:, 0:32], w_ref[R_L2:R_L2 + 32, 0:32],
                      preferred_element_type=jnp.float32)
        for j in range(1, 4):
            acc = acc + jnp.dot(h[:, 32 * j:32 * (j + 1)],
                                w_ref[R_L2:R_L2 + 32, 32 * j:32 * (j + 1)],
                                preferred_element_type=jnp.float32)
        h = jnp.maximum(acc + w_ref[R_B + 1:R_B + 2, 0:C1], 0.0)  # (64, 32)

        # ---- linear3 + relu ----
        h = jnp.dot(h, w_ref[R_MIX:R_MIX + C1, LANE_L3:LANE_L3 + INPUT_SIZE],
                    preferred_element_type=jnp.float32) + w_ref[R_B + 2:R_B + 3, 0:INPUT_SIZE]
        h = jnp.maximum(h, 0.0)                                   # (64, 7)

        # ---- conv2 (kernel_size=1) == pointwise mix over the last axis.
        #      rhs is (7, 128) with zeros beyond lane 6 -> lane-dense unmasked store.
        out = jnp.dot(h, w_ref[R_CV2:R_CV2 + INPUT_SIZE, :],
                      preferred_element_type=jnp.float32) + w_ref[R_B + 3:R_B + 4, :]
        o_ref[...] = out.astype(o_ref.dtype)                      # (64, 128)

    return kernel


def prepare_params(params):
    """One-time packing of all weights/biases into a single lane-dense f32 buffer.

    Hoisted out of the per-call path: transposes, im2col reshape, lane packing.
    """
    (w1, b1, wl1, bl1, wl2, bl2, wl3, bl3, w2, b2) = params

    # im2col conv1 weight: pad channel dim 7->8, reorder to [tap, chan] (idx = k*8 + c).
    w1p = jnp.pad(w1, ((0, 0), (0, C_IN_PAD - INPUT_SIZE), (0, 0)))       # (C1, 8, K)
    w1m = jnp.transpose(w1p, (0, 2, 1)).reshape(C1, KP)                   # (C1, 32)

    W = jnp.zeros((W_ROWS, 128), jnp.float32)
    W = W.at[R_L1:R_L1 + L, :].set(wl1.T)                                 # (32, 128)
    wl2t = wl2.T                                                          # (128, 32)
    for j in range(4):                                                    # 4 lane-adjacent blocks
        W = W.at[R_L2:R_L2 + 32, 32 * j:32 * (j + 1)].set(wl2t[32 * j:32 * (j + 1), :])
    W = W.at[R_MIX:R_MIX + C1, 0:KP].set(w1m)                             # (32, 32)
    W = W.at[R_MIX:R_MIX + C1, LANE_L3:LANE_L3 + INPUT_SIZE].set(wl3.T)   # (32, 7)
    W = W.at[R_MIX:R_MIX + C1, LANE_B1].set(b1)                           # (32,) column
    W = W.at[R_CV2:R_CV2 + INPUT_SIZE, 0:INPUT_SIZE].set(w2[:, :, 0].T)   # (7, 7), rest zero
    W = W.at[R_B + 0, 0:HID].set(bl1)
    W = W.at[R_B + 1, 0:C1].set(bl2)
    W = W.at[R_B + 2, 0:INPUT_SIZE].set(bl3)
    W = W.at[R_B + 3, 0:INPUT_SIZE].set(b2)
    return jax.device_put(W)


def autoencoder_forward(x, w_packed):
    """x: (N, INPUT_SIZE, L) float32 -> (N, C1, INPUT_SIZE) float32."""
    n = x.shape[0]
    # One fused wrapper pre-pass: channel pad 7->8, 'same' conv pad (1 left, 2 right),
    # and the K tap-shifted im2col views (hoists all unaligned lane shifts out of the kernel).
    xpad = jnp.pad(x, ((0, 0), (0, C_IN_PAD - INPUT_SIZE), (PAD_L, PAD_R)))     # (n, 8, LP)
    xtaps = jnp.concatenate([xpad[:, :, k:k + L] for k in range(K)], axis=1)    # (n, KP, L)

    out2d = pl.pallas_call(
        _make_kernel(n),
        out_shape=jax.ShapeDtypeStruct((n * C1, 128), jnp.float32),   # lane-dense slab
        scratch_shapes=[pltpu.VMEM((n * C1, L), jnp.float32)],
        # No grid / no BlockSpecs: single invocation, whole arrays resident in VMEM
        # (total footprint < 128 KiB, far under every generation's VMEM limit).
    )(xtaps, w_packed)

    return out2d[:, :INPUT_SIZE].reshape(n, C1, INPUT_SIZE)


def init_params(key):
    """Deterministic synthetic parameters matching the module's declared shapes."""
    ks = jax.random.split(key, 10)
    scale = 0.1
    w1 = scale * jax.random.normal(ks[0], (C1, INPUT_SIZE, K), jnp.float32)      # conv1.weight
    b1 = scale * jax.random.normal(ks[1], (C1,), jnp.float32)                    # conv1.bias
    wl1 = scale * jax.random.normal(ks[2], (HID, C1), jnp.float32)               # linear1.weight
    bl1 = scale * jax.random.normal(ks[3], (HID,), jnp.float32)
    wl2 = scale * jax.random.normal(ks[4], (C1, HID), jnp.float32)               # linear2.weight
    bl2 = scale * jax.random.normal(ks[5], (C1,), jnp.float32)
    wl3 = scale * jax.random.normal(ks[6], (INPUT_SIZE, C1), jnp.float32)        # linear3.weight
    bl3 = scale * jax.random.normal(ks[7], (INPUT_SIZE,), jnp.float32)
    w2 = scale * jax.random.normal(ks[8], (INPUT_SIZE, INPUT_SIZE, 1), jnp.float32)  # conv2.weight
    b2 = scale * jax.random.normal(ks[9], (INPUT_SIZE,), jnp.float32)
    return (w1, b1, wl1, bl1, wl2, bl2, wl3, bl3, w2, b2)


def _reference_forward(x, params):
    """Pure-JAX reference of the same forward (sanity check, unpacked params)."""
    (w1, b1, wl1, bl1, wl2, bl2, wl3, bl3, w2, b2) = params
    xpad = jnp.pad(x, ((0, 0), (0, 0), (PAD_L, PAD_R)))
    # conv1 (padding='same', PyTorch even-kernel convention: extra pad on the right)
    h = jnp.stack([
        jnp.einsum("oc,ncl->nol", w1[:, :, t], xpad[:, :, t:t + L])
        for t in range(K)]).sum(0) + b1[None, :, None]
    h = jnp.maximum(h @ wl1.T + bl1, 0.0)
    h = jnp.maximum(h @ wl2.T + bl2, 0.0)
    h = jnp.maximum(h @ wl3.T + bl3, 0.0)
    return h @ w2[:, :, 0].T + b2


if __name__ == "__main__":
    key = jax.random.PRNGKey(0)
    pkey, xkey = jax.random.split(key)
    params = init_params(pkey)
    w_packed = prepare_params(params)          # one-time param packing (outside the call path)
    x = jax.random.normal(xkey, (N, INPUT_SIZE, L), jnp.float32)

    fwd = jax.jit(autoencoder_forward)
    out = jax.block_until_ready(fwd(x, w_packed))

    ref = _reference_forward(x, params)
    assert out.shape == (N, C1, INPUT_SIZE), out.shape
    assert jnp.allclose(out, ref, atol=1e-4, rtol=1e-4), float(jnp.max(jnp.abs(out - ref)))
    print("KERNEL_OK")
</pallas_src>

<mosaic_0001>
module attributes {stable_mosaic.version = 11 : i64} {
  func.func @kernel(%arg0: memref<2x32x32xf32, #tpu.memory_space<vmem>>, %arg1: memref<112x128xf32, #tpu.memory_space<vmem>>, %arg2: memref<64x128xf32, #tpu.memory_space<vmem>>, %arg3: memref<64x32xf32, #tpu.memory_space<vmem>>) attributes {dimension_semantics = [], scalar_prefetch = 0 : i64, scratch_operands = 1 : i64, tpu.core_type = #tpu.core_type<tc>} {
    %c64 = arith.constant 64 : index
    %c0 = arith.constant 0 : index
    %0 = vector.load %arg1[%c64, %c0] : memref<112x128xf32, #tpu.memory_space<vmem>>, vector<32x32xf32>
    %c64_0 = arith.constant 64 : index
    %c40 = arith.constant 40 : index
    %1 = vector.load %arg1[%c64_0, %c40] : memref<112x128xf32, #tpu.memory_space<vmem>>, vector<32x1xf32>
    %c0_1 = arith.constant 0 : index
    %c0_2 = arith.constant 0 : index
    %c0_3 = arith.constant 0 : index
    %2 = vector.load %arg0[%c0_1, %c0_2, %c0_3] : memref<2x32x32xf32, #tpu.memory_space<vmem>>, vector<1x32x32xf32>
    %3 = vector.shape_cast %2 : vector<1x32x32xf32> to vector<32x32xf32>
    %cst = arith.constant dense<0.000000e+00> : vector<32x32xf32>
    %4 = tpu.matmul %0, %3, %cst {dimension_numbers = #tpu.dot_dimension_numbers<[1], [0], [0], [1], [0, 0, 1, 1], [], []>} : vector<32x32xf32>, vector<32x32xf32>, vector<32x32xf32> -> vector<32x32xf32>
    %5 = vector.broadcast %1 : vector<32x1xf32> to vector<32x32xf32>
    %6 = arith.addf %4, %5 : vector<32x32xf32>
    %c0_4 = arith.constant 0 : index
    %c0_5 = arith.constant 0 : index
    %7 = vector.load %arg3[%c0_4, %c0_5] : memref<64x32xf32, #tpu.memory_space<vmem>>, vector<32x32xf32>
    tpu.vector_store %arg3[%c0_4, %c0_5], %6 {strides = array<i32>} : memref<64x32xf32, #tpu.memory_space<vmem>>, vector<32x32xf32>,
    %c1 = arith.constant 1 : index
    %c0_6 = arith.constant 0 : index
    %c0_7 = arith.constant 0 : index
    %8 = vector.load %arg0[%c1, %c0_6, %c0_7] : memref<2x32x32xf32, #tpu.memory_space<vmem>>, vector<1x32x32xf32>
    %9 = vector.shape_cast %8 : vector<1x32x32xf32> to vector<32x32xf32>
    %cst_8 = arith.constant dense<0.000000e+00> : vector<32x32xf32>
    %10 = tpu.matmul %0, %9, %cst_8 {dimension_numbers = #tpu.dot_dimension_numbers<[1], [0], [0], [1], [0, 0, 1, 1], [], []>} : vector<32x32xf32>, vector<32x32xf32>, vector<32x32xf32> -> vector<32x32xf32>
    %11 = vector.broadcast %1 : vector<32x1xf32> to vector<32x32xf32>
    %12 = arith.addf %10, %11 : vector<32x32xf32>
    %c32 = arith.constant 32 : index
    %c0_9 = arith.constant 0 : index
    %13 = vector.load %arg3[%c32, %c0_9] : memref<64x32xf32, #tpu.memory_space<vmem>>, vector<32x32xf32>
    tpu.vector_store %arg3[%c32, %c0_9], %12 {strides = array<i32>} : memref<64x32xf32, #tpu.memory_space<vmem>>, vector<32x32xf32>,
    %c0_10 = arith.constant 0 : index
    %c0_11 = arith.constant 0 : index
    %14 = vector.load %arg3[%c0_10, %c0_11] : memref<64x32xf32, #tpu.memory_space<vmem>>, vector<64x32xf32>
    %c0_12 = arith.constant 0 : index
    %c0_13 = arith.constant 0 : index
    %15 = vector.load %arg1[%c0_12, %c0_13] : memref<112x128xf32, #tpu.memory_space<vmem>>, vector<32x128xf32>
    %cst_14 = arith.constant dense<0.000000e+00> : vector<64x128xf32>
    %16 = tpu.matmul %14, %15, %cst_14 {dimension_numbers = #tpu.dot_dimension_numbers<[1], [0], [0], [1], [0, 0, 1, 1], [], []>} : vector<64x32xf32>, vector<32x128xf32>, vector<64x128xf32> -> vector<64x128xf32>
    %c104 = arith.constant 104 : index
    %c0_15 = arith.constant 0 : index
    %17 = vector.load %arg1[%c104, %c0_15] : memref<112x128xf32, #tpu.memory_space<vmem>>, vector<1x128xf32>
    %18 = vector.broadcast %17 : vector<1x128xf32> to vector<64x128xf32>
    %19 = arith.addf %16, %18 : vector<64x128xf32>
    %cst_16 = arith.constant 0.000000e+00 : f32
    %20 = vector.broadcast %cst_16 : f32 to vector<64x128xf32>
    %21 = arith.maximumf %19, %20 : vector<64x128xf32>
    %22 = vector.extract_strided_slice %21 {offsets = [0, 0], sizes = [64, 32], strides = [1, 1]} : vector<64x128xf32> to vector<64x32xf32>
    %c32_17 = arith.constant 32 : index
    %c0_18 = arith.constant 0 : index
    %23 = vector.load %arg1[%c32_17, %c0_18] : memref<112x128xf32, #tpu.memory_space<vmem>>, vector<32x32xf32>
    %cst_19 = arith.constant dense<0.000000e+00> : vector<64x32xf32>
    %24 = tpu.matmul %22, %23, %cst_19 {dimension_numbers = #tpu.dot_dimension_numbers<[1], [0], [0], [1], [0, 0, 1, 1], [], []>} : vector<64x32xf32>, vector<32x32xf32>, vector<64x32xf32> -> vector<64x32xf32>
    %25 = vector.extract_strided_slice %21 {offsets = [0, 32], sizes = [64, 32], strides = [1, 1]} : vector<64x128xf32> to vector<64x32xf32>
    %c32_20 = arith.constant 32 : index
    %c32_21 = arith.constant 32 : index
    %26 = vector.load %arg1[%c32_20, %c32_21] : memref<112x128xf32, #tpu.memory_space<vmem>>, vector<32x32xf32>
    %cst_22 = arith.constant dense<0.000000e+00> : vector<64x32xf32>
    %27 = tpu.matmul %25, %26, %cst_22 {dimension_numbers = #tpu.dot_dimension_numbers<[1], [0], [0], [1], [0, 0, 1, 1], [], []>} : vector<64x32xf32>, vector<32x32xf32>, vector<64x32xf32> -> vector<64x32xf32>
    %28 = arith.addf %24, %27 : vector<64x32xf32>
    %29 = vector.extract_strided_slice %21 {offsets = [0, 64], sizes = [64, 32], strides = [1, 1]} : vector<64x128xf32> to vector<64x32xf32>
    %c32_23 = arith.constant 32 : index
    %c64_24 = arith.constant 64 : index
    %30 = vector.load %arg1[%c32_23, %c64_24] : memref<112x128xf32, #tpu.memory_space<vmem>>, vector<32x32xf32>
    %cst_25 = arith.constant dense<0.000000e+00> : vector<64x32xf32>
    %31 = tpu.matmul %29, %30, %cst_25 {dimension_numbers = #tpu.dot_dimension_numbers<[1], [0], [0], [1], [0, 0, 1, 1], [], []>} : vector<64x32xf32>, vector<32x32xf32>, vector<64x32xf32> -> vector<64x32xf32>
    %32 = arith.addf %28, %31 : vector<64x32xf32>
    %33 = vector.extract_strided_slice %21 {offsets = [0, 96], sizes = [64, 32], strides = [1, 1]} : vector<64x128xf32> to vector<64x32xf32>
    %c32_26 = arith.constant 32 : index
    %c96 = arith.constant 96 : index
    %34 = vector.load %arg1[%c32_26, %c96] : memref<112x128xf32, #tpu.memory_space<vmem>>, vector<32x32xf32>
    %cst_27 = arith.constant dense<0.000000e+00> : vector<64x32xf32>
    %35 = tpu.matmul %33, %34, %cst_27 {dimension_numbers = #tpu.dot_dimension_numbers<[1], [0], [0], [1], [0, 0, 1, 1], [], []>} : vector<64x32xf32>, vector<32x32xf32>, vector<64x32xf32> -> vector<64x32xf32>
    %36 = arith.addf %32, %35 : vector<64x32xf32>
    %c105 = arith.constant 105 : index
    %c0_28 = arith.constant 0 : index
    %37 = vector.load %arg1[%c105, %c0_28] : memref<112x128xf32, #tpu.memory_space<vmem>>, vector<1x32xf32>
    %38 = vector.broadcast %37 : vector<1x32xf32> to vector<64x32xf32>
    %39 = arith.addf %36, %38 : vector<64x32xf32>
    %cst_29 = arith.constant 0.000000e+00 : f32
    %40 = vector.broadcast %cst_29 : f32 to vector<64x32xf32>
    %41 = arith.maximumf %39, %40 : vector<64x32xf32>
    %c64_30 = arith.constant 64 : index
    %c32_31 = arith.constant 32 : index
    %42 = vector.load %arg1[%c64_30, %c32_31] : memref<112x128xf32, #tpu.memory_space<vmem>>, vector<32x7xf32>
    %cst_32 = arith.constant dense<0.000000e+00> : vector<64x7xf32>
    %43 = tpu.matmul %41, %42, %cst_32 {dimension_numbers = #tpu.dot_dimension_numbers<[1], [0], [0], [1], [0, 0, 1, 1], [], []>} : vector<64x32xf32>, vector<32x7xf32>, vector<64x7xf32> -> vector<64x7xf32>
    %c106 = arith.constant 106 : index
    %c0_33 = arith.constant 0 : index
    %44 = vector.load %arg1[%c106, %c0_33] : memref<112x128xf32, #tpu.memory_space<vmem>>, vector<1x7xf32>
    %45 = vector.broadcast %44 : vector<1x7xf32> to vector<64x7xf32>
    %46 = arith.addf %43, %45 : vector<64x7xf32>
    %cst_34 = arith.constant 0.000000e+00 : f32
    %47 = vector.broadcast %cst_34 : f32 to vector<64x7xf32>
    %48 = arith.maximumf %46, %47 : vector<64x7xf32>
    %c96_35 = arith.constant 96 : index
    %c0_36 = arith.constant 0 : index
    %49 = vector.load %arg1[%c96_35, %c0_36] : memref<112x128xf32, #tpu.memory_space<vmem>>, vector<7x128xf32>
    %cst_37 = arith.constant dense<0.000000e+00> : vector<64x128xf32>
    %50 = tpu.matmul %48, %49, %cst_37 {dimension_numbers = #tpu.dot_dimension_numbers<[1], [0], [0], [1], [0, 0, 1, 1], [], []>} : vector<64x7xf32>, vector<7x128xf32>, vector<64x128xf32> -> vector<64x128xf32>
    %c107 = arith.constant 107 : index
    %c0_38 = arith.constant 0 : index
    %51 = vector.load %arg1[%c107, %c0_38] : memref<112x128xf32, #tpu.memory_space<vmem>>, vector<1x128xf32>
    %52 = vector.broadcast %51 : vector<1x128xf32> to vector<64x128xf32>
    %53 = arith.addf %50, %52 : vector<64x128xf32>
    %c0_39 = arith.constant 0 : index
    %c0_40 = arith.constant 0 : index
    %54 = vector.load %arg2[%c0_39, %c0_40] : memref<64x128xf32, #tpu.memory_space<vmem>>, vector<64x128xf32>
    tpu.vector_store %arg2[%c0_39, %c0_40], %53 {strides = array<i32>} : memref<64x128xf32, #tpu.memory_space<vmem>>, vector<64x128xf32>,
    return
  }
}

</mosaic_0001>

<llo_original>
// kernel: autoencoder_forward.1
$region0: #{autoencoder_forward.1}
  #allocation0 [shape = 'u32[]', space=smem, size = 0x4, offset = 0x4, fixed_abs, tag = 'smem constant byte address 0x4 - core index']
  #allocation1 [shape = 'u32[72,128]{1,0:T(1,128)}', space=vmem, size = 0x9000, scoped, tag = 'internal scratch']
  #allocation2 [shape = 'f32[64,32]{1,0:T(8,128)}', space=vmem, size = 0x8000, scoped, tag = 'scratch operand']
  %s0 = inlined_call_operand.vmem [shape: f32[2,32,32], index: 0, kind: input, shape index: {}]
  %s1 = inlined_call_operand.vmem [shape: f32[112,128], index: 1, kind: input, shape index: {}]
  %s2 = inlined_call_operand.vmem [shape: f32[64,128], index: 2, kind: output, shape index: {}]
  %s3 = sld [smem:[#allocation0]]
  $region18: #{autoencoder_forward.1} parent=0
    _
  %s5 = ssub.s32 1, %s3
  %s6 = scalar_select 0, %s5, %s3
  // Predicated region
  $region2: #{autoencoder_forward.1} parent=0 // pred_check
    _
  $region3: #{autoencoder_forward.1} parent=0 // pred_check_branch
    %8 = sbr.rel (0) target = $region5
  $region4: #{autoencoder_forward.1} parent=0 // pred_region
    _
  $region5: #{autoencoder_forward.1} parent=0 // pred_fallthru
    _
  // Predicated region
  $region6: #{autoencoder_forward.1} parent=0 // pred_check
    _
  $region7: #{autoencoder_forward.1} parent=0 // pred_check_branch
    %10 = sbr.rel (0) target = $region9
  $region8: #{autoencoder_forward.1} parent=0 // pred_region
    _
  $region9: #{autoencoder_forward.1} parent=0 // pred_fallthru
    _
  %v11 = vld [vmem:[%s1 + $0x40] sm:$0xff]
  %v12 = vld [vmem:[%s1 + $0x48] sm:$0xff]
  %v13 = vld [vmem:[%s1 + $0x50] sm:$0xff]
  %v14 = vld [vmem:[%s1 + $0x58] sm:$0xff]
  %v15 = vld [vmem:[%s0] sm:$0xff]
  %v16 = vld [vmem:[%s0 + $0x8] sm:$0xff]
  %v17 = vld [vmem:[%s0 + $0x10] sm:$0xff]
  %v18 = vld [vmem:[%s0 + $0x18] sm:$0xff]
  %20 = vset.pattern.permute.xlu0 40
  %21 = vperm.xlu0 %20, %v11
  %v22 = vpop.permute.xlu0 %21
  %25 = vset.pattern.permute.xlu0 40
  %26 = vperm.xlu0 %25, %v12
  %v27 = vpop.permute.xlu0 %26
  %30 = vset.pattern.permute.xlu0 40
  %31 = vperm.xlu0 %30, %v13
  %v32 = vpop.permute.xlu0 %31
  %35 = vset.pattern.permute.xlu0 40
  %36 = vperm.xlu0 %35, %v14
  %v37 = vpop.permute.xlu0 %36
  %vm39 = vcmask 261120
  %v40 = vsel %vm39, %v11, 0
  %v42 = vsel %vm39, %v12, 0
  %v44 = vsel %vm39, %v13, 0
  %v46 = vsel %vm39, %v14, 0
  %48 = vmatpush.msra.mxu0 0.0
  %49 = vmatpush.msra.mxu0 0.0
  %50 = vmatpush.msra.mxu0 0.0
  %51 = vmatpush.msra.mxu0 0.0
  %52 = vmatpush.msra.mxu0 0.0
  %53 = vmatpush.msra.mxu0 0.0
  %54 = vmatpush.msra.mxu0 0.0
  %55 = vmatpush.msra.mxu0 0.0
  %56 = vmatpush.msra.mxu0 0.0
  %57 = vmatpush.msra.mxu0 0.0
  %58 = vmatpush.msra.mxu0 0.0
  %59 = vmatpush.msra.mxu0 0.0
  %60 = vmatpush.msra.mxu0 %v18
  %61 = vmatpush.msra.mxu0 %v17
  %62 = vmatpush.msra.mxu0 %v16
  %63 = vmatpush.msra.mxu0 %v15
  %64 = vmatmul.f32.gmra.mxu0 %v40
  %v65 = vpop.f32.mrf.mxu0
  %v66 = vadd.f32 %v22, %v65
  %67 = vmatmul.f32.gmra.mxu0 %v42
  %v68 = vpop.f32.mrf.mxu0
  %v69 = vadd.f32 %v27, %v68
  %70 = vmatmul.f32.gmra.mxu0 %v44
  %v71 = vpop.f32.mrf.mxu0
  %v72 = vadd.f32 %v32, %v71
  %73 = vmatmul.f32.gmra.mxu0 %v46
  %v74 = vpop.f32.mrf.mxu0
  %v75 = vadd.f32 %v37, %v74
  %76 = vdwg.mxu0
  %77 = vst.msk [vmem:[#allocation2] sm:$0xff] %vm39, %v66
  %78 = vst.msk [vmem:[#allocation2 + $0x8] sm:$0xff] %vm39, %v69
  %79 = vst.msk [vmem:[#allocation2 + $0x10] sm:$0xff] %vm39, %v72
  %80 = vst.msk [vmem:[#allocation2 + $0x18] sm:$0xff] %vm39, %v75
  %s81 = scalar_lea.vmem %s0, 32
  %v82 = vld [vmem:[%s81] sm:$0xff]
  %v83 = vld [vmem:[%s81 + $0x8] sm:$0xff]
  %v84 = vld [vmem:[%s81 + $0x10] sm:$0xff]
  %v85 = vld [vmem:[%s81 + $0x18] sm:$0xff]
  %86 = vmatpush.msra.mxu0 0.0
  %87 = vmatpush.msra.mxu0 0.0
  %88 = vmatpush.msra.mxu0 0.0
  %89 = vmatpush.msra.mxu0 0.0
  %90 = vmatpush.msra.mxu0 0.0
  %91 = vmatpush.msra.mxu0 0.0
  %92 = vmatpush.msra.mxu0 0.0
  %93 = vmatpush.msra.mxu0 0.0
  %94 = vmatpush.msra.mxu0 0.0
  %95 = vmatpush.msra.mxu0 0.0
  %96 = vmatpush.msra.mxu0 0.0
  %97 = vmatpush.msra.mxu0 0.0
  %98 = vmatpush.msra.mxu0 %v85
  %99 = vmatpush.msra.mxu0 %v84
  %100 = vmatpush.msra.mxu0 %v83
  %101 = vmatpush.msra.mxu0 %v82
  %102 = vmatmul.f32.gmra.mxu0 %v40
  %v103 = vpop.f32.mrf.mxu0
  %v104 = vadd.f32 %v22, %v103
  %105 = vmatmul.f32.gmra.mxu0 %v42
  %v106 = vpop.f32.mrf.mxu0
  %v107 = vadd.f32 %v27, %v106
  %108 = vmatmul.f32.gmra.mxu0 %v44
  %v109 = vpop.f32.mrf.mxu0
  %v110 = vadd.f32 %v32, %v109
  %111 = vmatmul.f32.gmra.mxu0 %v46
  %v112 = vpop.f32.mrf.mxu0
  %v113 = vadd.f32 %v37, %v112
  %114 = vdwg.mxu0
  %115 = vst.msk [vmem:[#allocation2 + $0x20] sm:$0xff] %vm39, %v104
  %116 = vst.msk [vmem:[#allocation2 + $0x28] sm:$0xff] %vm39, %v107
  %117 = vst.msk [vmem:[#allocation2 + $0x30] sm:$0xff] %vm39, %v110
  %118 = vst.msk [vmem:[#allocation2 + $0x38] sm:$0xff] %vm39, %v113
  %v119 = vld [vmem:[#allocation2] sm:$0xff]
  %v120 = vld [vmem:[#allocation2 + $0x8] sm:$0xff]
  %v121 = vld [vmem:[#allocation2 + $0x10] sm:$0xff]
  %v122 = vld [vmem:[#allocation2 + $0x18] sm:$0xff]
  %v123 = vld [vmem:[#allocation2 + $0x20] sm:$0xff]
  %v124 = vld [vmem:[#allocation2 + $0x28] sm:$0xff]
  %v125 = vld [vmem:[#allocation2 + $0x30] sm:$0xff]
  %v126 = vld [vmem:[#allocation2 + $0x38] sm:$0xff]
  %v127 = vld [vmem:[%s1] sm:$0xff]
  %v128 = vld [vmem:[%s1 + $0x8] sm:$0xff]
  %v129 = vld [vmem:[%s1 + $0x10] sm:$0xff]
  %v130 = vld [vmem:[%s1 + $0x18] sm:$0xff]
  %v131 = vld [vmem:[%s1 + $0x68] sm:$0x1]
  %v132 = vperm.slane %v131, 0
  %v134 = vsel %vm39, %v119, 0
  %v137 = vsel %vm39, %v120, 0
  %v140 = vsel %vm39, %v121, 0
  %v143 = vsel %vm39, %v122, 0
  %v146 = vsel %vm39, %v123, 0
  %v149 = vsel %vm39, %v124, 0
  %v152 = vsel %vm39, %v125, 0
  %v155 = vsel %vm39, %v126, 0
  %157 = vmatpush.msra.mxu0 0.0
  %158 = vmatpush.msra.mxu0 0.0
  %159 = vmatpush.msra.mxu0 0.0
  %160 = vmatpush.msra.mxu0 0.0
  %161 = vmatpush.msra.mxu0 0.0
  %162 = vmatpush.msra.mxu0 0.0
  %163 = vmatpush.msra.mxu0 0.0
  %164 = vmatpush.msra.mxu0 0.0
  %165 = vmatpush.msra.mxu0 0.0
  %166 = vmatpush.msra.mxu0 0.0
  %167 = vmatpush.msra.mxu0 0.0
  %168 = vmatpush.msra.mxu0 0.0
  %169 = vmatpush.msra.mxu0 %v130
  %170 = vmatpush.msra.mxu0 %v129
  %171 = vmatpush.msra.mxu0 %v128
  %172 = vmatpush.msra.mxu0 %v127
  %173 = vmatmul.f32.gmra.mxu0 %v134
  %v174 = vpop.f32.mrf.mxu0
  %v175 = vadd.f32 %v132, %v174
  %176 = vmatmul.f32.gmra.mxu0 %v137
  %v177 = vpop.f32.mrf.mxu0
  %v178 = vadd.f32 %v132, %v177
  %179 = vmatmul.f32.gmra.mxu0 %v140
  %v180 = vpop.f32.mrf.mxu0
  %v181 = vadd.f32 %v132, %v180
  %182 = vmatmul.f32.gmra.mxu0 %v143
  %v183 = vpop.f32.mrf.mxu0
  %v184 = vadd.f32 %v132, %v183
  %185 = vmatmul.f32.gmra.mxu0 %v146
  %v186 = vpop.f32.mrf.mxu0
  %v187 = vadd.f32 %v132, %v186
  %188 = vmatmul.f32.gmra.mxu0 %v149
  %v189 = vpop.f32.mrf.mxu0
  %v190 = vadd.f32 %v132, %v189
  %191 = vmatmul.f32.gmra.mxu0 %v152
  %v192 = vpop.f32.mrf.mxu0
  %v193 = vadd.f32 %v132, %v192
  %194 = vmatmul.f32.gmra.mxu0 %v155
  %v195 = vpop.f32.mrf.mxu0
  %v196 = vadd.f32 %v132, %v195
  %197 = vdwg.mxu0
  %v198 = vmax.f32 %v175, 0.0
  %v199 = vmax.f32 %v178, 0.0
  %v200 = vmax.f32 %v181, 0.0
  %v201 = vmax.f32 %v184, 0.0
  %v202 = vmax.f32 %v187, 0.0
  %v203 = vmax.f32 %v190, 0.0
  %v204 = vmax.f32 %v193, 0.0
  %v205 = vmax.f32 %v196, 0.0
  %v206 = vld [vmem:[%s1 + $0x20] sm:$0xff]
  %v207 = vld [vmem:[%s1 + $0x28] sm:$0xff]
  %v208 = vld [vmem:[%s1 + $0x30] sm:$0xff]
  %v209 = vld [vmem:[%s1 + $0x38] sm:$0xff]
  %218 = vrot.lane.b32.xlu0 %v198, 96
  %v219 = vpop.permute.xlu0 %218
  %220 = vrot.lane.b32.xlu0 %v199, 96
  %v221 = vpop.permute.xlu0 %220
  %222 = vrot.lane.b32.xlu0 %v200, 96
  %v223 = vpop.permute.xlu0 %222
  %224 = vrot.lane.b32.xlu0 %v201, 96
  %v225 = vpop.permute.xlu0 %224
  %226 = vrot.lane.b32.xlu0 %v202, 96
  %v227 = vpop.permute.xlu0 %226
  %228 = vrot.lane.b32.xlu0 %v203, 96
  %v229 = vpop.permute.xlu0 %228
  %230 = vrot.lane.b32.xlu0 %v204, 96
  %v231 = vpop.permute.xlu0 %230
  %232 = vrot.lane.b32.xlu0 %v205, 96
  %v233 = vpop.permute.xlu0 %232
  %238 = vrot.lane.b32.xlu0 %v206, 96
  %v239 = vpop.permute.xlu0 %238
  %240 = vrot.lane.b32.xlu0 %v207, 96
  %v241 = vpop.permute.xlu0 %240
  %242 = vrot.lane.b32.xlu0 %v208, 96
  %v243 = vpop.permute.xlu0 %242
  %244 = vrot.lane.b32.xlu0 %v209, 96
  %v245 = vpop.permute.xlu0 %244
  %v250 = vsel %vm39, %v219, 0
  %v252 = vsel %vm39, %v221, 0
  %v254 = vsel %vm39, %v223, 0
  %v256 = vsel %vm39, %v225, 0
  %v258 = vsel %vm39, %v227, 0
  %v260 = vsel %vm39, %v229, 0
  %v262 = vsel %vm39, %v231, 0
  %v264 = vsel %vm39, %v233, 0
  %266 = vmatpush.msra.mxu0 0.0
  %267 = vmatpush.msra.mxu0 0.0
  %268 = vmatpush.msra.mxu0 0.0
  %269 = vmatpush.msra.mxu0 0.0
  %270 = vmatpush.msra.mxu0 0.0
  %271 = vmatpush.msra.mxu0 0.0
  %272 = vmatpush.msra.mxu0 0.0
  %273 = vmatpush.msra.mxu0 0.0
  %274 = vmatpush.msra.mxu0 0.0
  %275 = vmatpush.msra.mxu0 0.0
  %276 = vmatpush.msra.mxu0 0.0
  %277 = vmatpush.msra.mxu0 0.0
  %278 = vmatpush.msra.mxu0 %v245
  %279 = vmatpush.msra.mxu0 %v243
  %280 = vmatpush.msra.mxu0 %v241
  %281 = vmatpush.msra.mxu0 %v239
  %282 = vmatmul.f32.gmra.mxu0 %v250
  %v283 = vpop.f32.mrf.mxu0
  %v284 = vadd.f32 0.0, %v283
  %285 = vmatmul.f32.gmra.mxu0 %v252
  %v286 = vpop.f32.mrf.mxu0
  %v287 = vadd.f32 0.0, %v286
  %288 = vmatmul.f32.gmra.mxu0 %v254
  %v289 = vpop.f32.mrf.mxu0
  %v290 = vadd.f32 0.0, %v289
  %291 = vmatmul.f32.gmra.mxu0 %v256
  %v292 = vpop.f32.mrf.mxu0
  %v293 = vadd.f32 0.0, %v292
  %294 = vmatmul.f32.gmra.mxu0 %v258
  %v295 = vpop.f32.mrf.mxu0
  %v296 = vadd.f32 0.0, %v295
  %297 = vmatmul.f32.gmra.mxu0 %v260
  %v298 = vpop.f32.mrf.mxu0
  %v299 = vadd.f32 0.0, %v298
  %300 = vmatmul.f32.gmra.mxu0 %v262
  %v301 = vpop.f32.mrf.mxu0
  %v302 = vadd.f32 0.0, %v301
  %303 = vmatmul.f32.gmra.mxu0 %v264
  %v304 = vpop.f32.mrf.mxu0
  %v305 = vadd.f32 0.0, %v304
  %306 = vdwg.mxu0
  %v307 = vsel %vm39, %v198, 0
  %v309 = vsel %vm39, %v199, 0
  %v311 = vsel %vm39, %v200, 0
  %v313 = vsel %vm39, %v201, 0
  %v315 = vsel %vm39, %v202, 0
  %v317 = vsel %vm39, %v203, 0
  %v319 = vsel %vm39, %v204, 0
  %v321 = vsel %vm39, %v205, 0
  %323 = vmatpush.msra.mxu0 0.0
  %324 = vmatpush.msra.mxu0 0.0
  %325 = vmatpush.msra.mxu0 0.0
  %326 = vmatpush.msra.mxu0 0.0
  %327 = vmatpush.msra.mxu0 0.0
  %328 = vmatpush.msra.mxu0 0.0
  %329 = vmatpush.msra.mxu0 0.0
  %330 = vmatpush.msra.mxu0 0.0
  %331 = vmatpush.msra.mxu0 0.0
  %332 = vmatpush.msra.mxu0 0.0
  %333 = vmatpush.msra.mxu0 0.0
  %334 = vmatpush.msra.mxu0 0.0
  %335 = vmatpush.msra.mxu0 %v209
  %336 = vmatpush.msra.mxu0 %v208
  %337 = vmatpush.msra.mxu0 %v207
  %338 = vmatpush.msra.mxu0 %v206
  %339 = vmatmul.f32.gmra.mxu0 %v307
  %v340 = vpop.f32.mrf.mxu0
  %v341 = vadd.f32 %v284, %v340
  %342 = vmatmul.f32.gmra.mxu0 %v309
  %v343 = vpop.f32.mrf.mxu0
  %v344 = vadd.f32 %v287, %v343
  %345 = vmatmul.f32.gmra.mxu0 %v311
  %v346 = vpop.f32.mrf.mxu0
  %v347 = vadd.f32 %v290, %v346
  %348 = vmatmul.f32.gmra.mxu0 %v313
  %v349 = vpop.f32.mrf.mxu0
  %v350 = vadd.f32 %v293, %v349
  %351 = vmatmul.f32.gmra.mxu0 %v315
  %v352 = vpop.f32.mrf.mxu0
  %v353 = vadd.f32 %v296, %v352
  %354 = vmatmul.f32.gmra.mxu0 %v317
  %v355 = vpop.f32.mrf.mxu0
  %v356 = vadd.f32 %v299, %v355
  %357 = vmatmul.f32.gmra.mxu0 %v319
  %v358 = vpop.f32.mrf.mxu0
  %v359 = vadd.f32 %v302, %v358
  %360 = vmatmul.f32.gmra.mxu0 %v321
  %v361 = vpop.f32.mrf.mxu0
  %v362 = vadd.f32 %v305, %v361
  %363 = vdwg.mxu0
  %364 = vrot.lane.b32.xlu0 %v198, 64
  %v365 = vpop.permute.xlu0 %364
  %366 = vrot.lane.b32.xlu0 %v199, 64
  %v367 = vpop.permute.xlu0 %366
  %368 = vrot.lane.b32.xlu0 %v200, 64
  %v369 = vpop.permute.xlu0 %368
  %370 = vrot.lane.b32.xlu0 %v201, 64
  %v371 = vpop.permute.xlu0 %370
  %372 = vrot.lane.b32.xlu0 %v202, 64
  %v373 = vpop.permute.xlu0 %372
  %374 = vrot.lane.b32.xlu0 %v203, 64
  %v375 = vpop.permute.xlu0 %374
  %376 = vrot.lane.b32.xlu0 %v204, 64
  %v377 = vpop.permute.xlu0 %376
  %378 = vrot.lane.b32.xlu0 %v205, 64
  %v379 = vpop.permute.xlu0 %378
  %380 = vrot.lane.b32.xlu0 %v206, 64
  %v381 = vpop.permute.xlu0 %380
  %382 = vrot.lane.b32.xlu0 %v207, 64
  %v383 = vpop.permute.xlu0 %382
  %384 = vrot.lane.b32.xlu0 %v208, 64
  %v385 = vpop.permute.xlu0 %384
  %386 = vrot.lane.b32.xlu0 %v209, 64
  %v387 = vpop.permute.xlu0 %386
  %v392 = vsel %vm39, %v365, 0
  %v394 = vsel %vm39, %v367, 0
  %v396 = vsel %vm39, %v369, 0
  %v398 = vsel %vm39, %v371, 0
  %v400 = vsel %vm39, %v373, 0
  %v402 = vsel %vm39, %v375, 0
  %v404 = vsel %vm39, %v377, 0
  %v406 = vsel %vm39, %v379, 0
  %408 = vmatpush.msra.mxu0 0.0
  %409 = vmatpush.msra.mxu0 0.0
  %410 = vmatpush.msra.mxu0 0.0
  %411 = vmatpush.msra.mxu0 0.0
  %412 = vmatpush.msra.mxu0 0.0
  %413 = vmatpush.msra.mxu0 0.0
  %414 = vmatpush.msra.mxu0 0.0
  %415 = vmatpush.msra.mxu0 0.0
  %416 = vmatpush.msra.mxu0 0.0
  %417 = vmatpush.msra.mxu0 0.0
  %418 = vmatpush.msra.mxu0 0.0
  %419 = vmatpush.msra.mxu0 0.0
  %420 = vmatpush.msra.mxu0 %v387
  %421 = vmatpush.msra.mxu0 %v385
  %422 = vmatpush.msra.mxu0 %v383
  %423 = vmatpush.msra.mxu0 %v381
  %424 = vmatmul.f32.gmra.mxu0 %v392
  %v425 = vpop.f32.mrf.mxu0
  %v426 = vadd.f32 0.0, %v425
  %427 = vmatmul.f32.gmra.mxu0 %v394
  %v428 = vpop.f32.mrf.mxu0
  %v429 = vadd.f32 0.0, %v428
  %430 = vmatmul.f32.gmra.mxu0 %v396
  %v431 = vpop.f32.mrf.mxu0
  %v432 = vadd.f32 0.0, %v431
  %433 = vmatmul.f32.gmra.mxu0 %v398
  %v434 = vpop.f32.mrf.mxu0
  %v435 = vadd.f32 0.0, %v434
  %436 = vmatmul.f32.gmra.mxu0 %v400
  %v437 = vpop.f32.mrf.mxu0
  %v438 = vadd.f32 0.0, %v437
  %439 = vmatmul.f32.gmra.mxu0 %v402
  %v440 = vpop.f32.mrf.mxu0
  %v441 = vadd.f32 0.0, %v440
  %442 = vmatmul.f32.gmra.mxu0 %v404
  %v443 = vpop.f32.mrf.mxu0
  %v444 = vadd.f32 0.0, %v443
  %445 = vmatmul.f32.gmra.mxu0 %v406
  %v446 = vpop.f32.mrf.mxu0
  %v447 = vadd.f32 0.0, %v446
  %448 = vdwg.mxu0
  %v449 = vadd.f32 %v341, %v426
  %v450 = vadd.f32 %v344, %v429
  %v451 = vadd.f32 %v347, %v432
  %v452 = vadd.f32 %v350, %v435
  %v453 = vadd.f32 %v353, %v438
  %v454 = vadd.f32 %v356, %v441
  %v455 = vadd.f32 %v359, %v444
  %v456 = vadd.f32 %v362, %v447
  %457 = vrot.lane.b32.xlu0 %v198, 32
  %v458 = vpop.permute.xlu0 %457
  %459 = vrot.lane.b32.xlu0 %v199, 32
  %v460 = vpop.permute.xlu0 %459
  %461 = vrot.lane.b32.xlu0 %v200, 32
  %v462 = vpop.permute.xlu0 %461
  %463 = vrot.lane.b32.xlu0 %v201, 32
  %v464 = vpop.permute.xlu0 %463
  %465 = vrot.lane.b32.xlu0 %v202, 32
  %v466 = vpop.permute.xlu0 %465
  %467 = vrot.lane.b32.xlu0 %v203, 32
  %v468 = vpop.permute.xlu0 %467
  %469 = vrot.lane.b32.xlu0 %v204, 32
  %v470 = vpop.permute.xlu0 %469
  %471 = vrot.lane.b32.xlu0 %v205, 32
  %v472 = vpop.permute.xlu0 %471
  %473 = vrot.lane.b32.xlu0 %v206, 32
  %v474 = vpop.permute.xlu0 %473
  %475 = vrot.lane.b32.xlu0 %v207, 32
  %v476 = vpop.permute.xlu0 %475
  %477 = vrot.lane.b32.xlu0 %v208, 32
  %v478 = vpop.permute.xlu0 %477
  %479 = vrot.lane.b32.xlu0 %v209, 32
  %v480 = vpop.permute.xlu0 %479
  %v485 = vsel %vm39, %v458, 0
  %v487 = vsel %vm39, %v460, 0
  %v489 = vsel %vm39, %v462, 0
  %v491 = vsel %vm39, %v464, 0
  %v493 = vsel %vm39, %v466, 0
  %v495 = vsel %vm39, %v468, 0
  %v497 = vsel %vm39, %v470, 0
  %v499 = vsel %vm39, %v472, 0
  %501 = vmatpush.msra.mxu0 0.0
  %502 = vmatpush.msra.mxu0 0.0
  %503 = vmatpush.msra.mxu0 0.0
  %504 = vmatpush.msra.mxu0 0.0
  %505 = vmatpush.msra.mxu0 0.0
  %506 = vmatpush.msra.mxu0 0.0
  %507 = vmatpush.msra.mxu0 0.0
  %508 = vmatpush.msra.mxu0 0.0
  %509 = vmatpush.msra.mxu0 0.0
  %510 = vmatpush.msra.mxu0 0.0
  %511 = vmatpush.msra.mxu0 0.0
  %512 = vmatpush.msra.mxu0 0.0
  %513 = vmatpush.msra.mxu0 %v480
  %514 = vmatpush.msra.mxu0 %v478
  %515 = vmatpush.msra.mxu0 %v476
  %516 = vmatpush.msra.mxu0 %v474
  %517 = vmatmul.f32.gmra.mxu0 %v485
  %v518 = vpop.f32.mrf.mxu0
  %v519 = vadd.f32 0.0, %v518
  %520 = vmatmul.f32.gmra.mxu0 %v487
  %v521 = vpop.f32.mrf.mxu0
  %v522 = vadd.f32 0.0, %v521
  %523 = vmatmul.f32.gmra.mxu0 %v489
  %v524 = vpop.f32.mrf.mxu0
  %v525 = vadd.f32 0.0, %v524
  %526 = vmatmul.f32.gmra.mxu0 %v491
  %v527 = vpop.f32.mrf.mxu0
  %v528 = vadd.f32 0.0, %v527
  %529 = vmatmul.f32.gmra.mxu0 %v493
  %v530 = vpop.f32.mrf.mxu0
  %v531 = vadd.f32 0.0, %v530
  %532 = vmatmul.f32.gmra.mxu0 %v495
  %v533 = vpop.f32.mrf.mxu0
  %v534 = vadd.f32 0.0, %v533
  %535 = vmatmul.f32.gmra.mxu0 %v497
  %v536 = vpop.f32.mrf.mxu0
  %v537 = vadd.f32 0.0, %v536
  %538 = vmatmul.f32.gmra.mxu0 %v499
  %v539 = vpop.f32.mrf.mxu0
  %v540 = vadd.f32 0.0, %v539
  %541 = vdwg.mxu0
  %v542 = vadd.f32 %v449, %v519
  %v543 = vadd.f32 %v450, %v522
  %v544 = vadd.f32 %v451, %v525
  %v545 = vadd.f32 %v452, %v528
  %v546 = vadd.f32 %v453, %v531
  %v547 = vadd.f32 %v454, %v534
  %v548 = vadd.f32 %v455, %v537
  %v549 = vadd.f32 %v456, %v540
  %v550 = vld [vmem:[%s1 + $0x69] sm:$0x1]
  %v551 = vperm.slane %v550, 0
  %v552 = vadd.f32 %v542, %v551
  %v553 = vadd.f32 %v543, %v551
  %v554 = vadd.f32 %v544, %v551
  %v555 = vadd.f32 %v545, %v551
  %v556 = vadd.f32 %v546, %v551
  %v557 = vadd.f32 %v547, %v551
  %v558 = vadd.f32 %v548, %v551
  %v559 = vadd.f32 %v549, %v551
  %v560 = vmax.f32 %v552, 0.0
  %v561 = vmax.f32 %v553, 0.0
  %v562 = vmax.f32 %v554, 0.0
  %v563 = vmax.f32 %v555, 0.0
  %v564 = vmax.f32 %v556, 0.0
  %v565 = vmax.f32 %v557, 0.0
  %v566 = vmax.f32 %v558, 0.0
  %v567 = vmax.f32 %v559, 0.0
  %v568 = vld [vmem:[%s1 + $0x40] sm:$0xff]
  %v569 = vld [vmem:[%s1 + $0x48] sm:$0xff]
  %v570 = vld [vmem:[%s1 + $0x50] sm:$0xff]
  %v571 = vld [vmem:[%s1 + $0x58] sm:$0xff]
  %v572 = vld [vmem:[%s1 + $0x6a] sm:$0x1]
  %v573 = vperm.slane %v572, 0
  %578 = vrot.lane.b32.xlu0 %v568, 96
  %v579 = vpop.permute.xlu0 %578
  %580 = vrot.lane.b32.xlu0 %v569, 96
  %v581 = vpop.permute.xlu0 %580
  %582 = vrot.lane.b32.xlu0 %v570, 96
  %v583 = vpop.permute.xlu0 %582
  %584 = vrot.lane.b32.xlu0 %v571, 96
  %v585 = vpop.permute.xlu0 %584
  %v591 = vsel %vm39, %v560, 0
  %v594 = vsel %vm39, %v561, 0
  %v597 = vsel %vm39, %v562, 0
  %v600 = vsel %vm39, %v563, 0
  %v603 = vsel %vm39, %v564, 0
  %v606 = vsel %vm39, %v565, 0
  %v609 = vsel %vm39, %v566, 0
  %v612 = vsel %vm39, %v567, 0
  %614 = vmatpush.msra.mxu0 0.0
  %615 = vmatpush.msra.mxu0 0.0
  %616 = vmatpush.msra.mxu0 0.0
  %617 = vmatpush.msra.mxu0 0.0
  %618 = vmatpush.msra.mxu0 0.0
  %619 = vmatpush.msra.mxu0 0.0
  %620 = vmatpush.msra.mxu0 0.0
  %621 = vmatpush.msra.mxu0 0.0
  %622 = vmatpush.msra.mxu0 0.0
  %623 = vmatpush.msra.mxu0 0.0
  %624 = vmatpush.msra.mxu0 0.0
  %625 = vmatpush.msra.mxu0 0.0
  %626 = vmatpush.msra.mxu0 %v585
  %627 = vmatpush.msra.mxu0 %v583
  %628 = vmatpush.msra.mxu0 %v581
  %629 = vmatpush.msra.mxu0 %v579
  %630 = vmatmul.f32.gmra.mxu0 %v591
  %v631 = vpop.f32.mrf.mxu0
  %v632 = vadd.f32 %v573, %v631
  %633 = vmatmul.f32.gmra.mxu0 %v594
  %v634 = vpop.f32.mrf.mxu0
  %v635 = vadd.f32 %v573, %v634
  %636 = vmatmul.f32.gmra.mxu0 %v597
  %v637 = vpop.f32.mrf.mxu0
  %v638 = vadd.f32 %v573, %v637
  %639 = vmatmul.f32.gmra.mxu0 %v600
  %v640 = vpop.f32.mrf.mxu0
  %v641 = vadd.f32 %v573, %v640
  %642 = vmatmul.f32.gmra.mxu0 %v603
  %v643 = vpop.f32.mrf.mxu0
  %v644 = vadd.f32 %v573, %v643
  %645 = vmatmul.f32.gmra.mxu0 %v606
  %v646 = vpop.f32.mrf.mxu0
  %v647 = vadd.f32 %v573, %v646
  %648 = vmatmul.f32.gmra.mxu0 %v609
  %v649 = vpop.f32.mrf.mxu0
  %v650 = vadd.f32 %v573, %v649
  %651 = vmatmul.f32.gmra.mxu0 %v612
  %v652 = vpop.f32.mrf.mxu0
  %v653 = vadd.f32 %v573, %v652
  %654 = vdwg.mxu0
  %v655 = vmax.f32 %v632, 0.0
  %v656 = vmax.f32 %v635, 0.0
  %v657 = vmax.f32 %v638, 0.0
  %v658 = vmax.f32 %v641, 0.0
  %v659 = vmax.f32 %v644, 0.0
  %v660 = vmax.f32 %v647, 0.0
  %v661 = vmax.f32 %v650, 0.0
  %v662 = vmax.f32 %v653, 0.0
  %v663 = vld [vmem:[%s1 + $0x60] sm:$0x7f]
  %v664 = vld [vmem:[%s1 + $0x6b] sm:$0x1]
  %v665 = vperm.slane %v664, 0
  %vm666 = vcmask 56320
  %v668 = vsel %vm666, %v655, 0
  %v671 = vsel %vm666, %v656, 0
  %v674 = vsel %vm666, %v657, 0
  %v677 = vsel %vm666, %v658, 0
  %v680 = vsel %vm666, %v659, 0
  %v683 = vsel %vm666, %v660, 0
  %v686 = vsel %vm666, %v661, 0
  %v689 = vsel %vm666, %v662, 0
  %vm691 = vcmask 1046528
  %v693 = vsel %vm691, %v663, 0
  %695 = vmatpush.msra.mxu0 0.0
  %696 = vmatpush.msra.mxu0 0.0
  %697 = vmatpush.msra.mxu0 0.0
  %698 = vmatpush.msra.mxu0 0.0
  %699 = vmatpush.msra.mxu0 0.0
  %700 = vmatpush.msra.mxu0 0.0
  %701 = vmatpush.msra.mxu0 0.0
  %702 = vmatpush.msra.mxu0 0.0
  %703 = vmatpush.msra.mxu0 0.0
  %704 = vmatpush.msra.mxu0 0.0
  %705 = vmatpush.msra.mxu0 0.0
  %706 = vmatpush.msra.mxu0 0.0
  %707 = vmatpush.msra.mxu0 0.0
  %708 = vmatpush.msra.mxu0 0.0
  %709 = vmatpush.msra.mxu0 0.0
  %710 = vmatpush.msra.mxu0 %v693
  %711 = vmatmul.f32.gmra.mxu0 %v668
  %v712 = vpop.f32.mrf.mxu0
  %v713 = vadd.f32 %v665, %v712
  %714 = vmatmul.f32.gmra.mxu0 %v671
  %v715 = vpop.f32.mrf.mxu0
  %v716 = vadd.f32 %v665, %v715
  %717 = vmatmul.f32.gmra.mxu0 %v674
  %v718 = vpop.f32.mrf.mxu0
  %v719 = vadd.f32 %v665, %v718
  %720 = vmatmul.f32.gmra.mxu0 %v677
  %v721 = vpop.f32.mrf.mxu0
  %v722 = vadd.f32 %v665, %v721
  %723 = vmatmul.f32.gmra.mxu0 %v680
  %v724 = vpop.f32.mrf.mxu0
  %v725 = vadd.f32 %v665, %v724
  %726 = vmatmul.f32.gmra.mxu0 %v683
  %v727 = vpop.f32.mrf.mxu0
  %v728 = vadd.f32 %v665, %v727
  %729 = vmatmul.f32.gmra.mxu0 %v686
  %v730 = vpop.f32.mrf.mxu0
  %v731 = vadd.f32 %v665, %v730
  %732 = vmatmul.f32.gmra.mxu0 %v689
  %v733 = vpop.f32.mrf.mxu0
  %v734 = vadd.f32 %v665, %v733
  %735 = vdwg.mxu0
  %736 = vst [vmem:[%s2] sm:$0xff] %v713
  %737 = vst [vmem:[%s2 + $0x8] sm:$0xff] %v716
  %738 = vst [vmem:[%s2 + $0x10] sm:$0xff] %v719
  %739 = vst [vmem:[%s2 + $0x18] sm:$0xff] %v722
  %740 = vst [vmem:[%s2 + $0x20] sm:$0xff] %v725
  %741 = vst [vmem:[%s2 + $0x28] sm:$0xff] %v728
  %742 = vst [vmem:[%s2 + $0x30] sm:$0xff] %v731
  %743 = vst [vmem:[%s2 + $0x38] sm:$0xff] %v734
  // Predicated region
  $region10: #{autoencoder_forward.1} parent=0 // pred_check
    _
  $region11: #{autoencoder_forward.1} parent=0 // pred_check_branch
    %745 = sbr.rel (0) target = $region13
  $region12: #{autoencoder_forward.1} parent=0 // pred_region
    _
  $region13: #{autoencoder_forward.1} parent=0 // pred_fallthru
    _
  // Predicated region
  $region14: #{autoencoder_forward.1} parent=0 // pred_check
    _
  $region15: #{autoencoder_forward.1} parent=0 // pred_check_branch
    %747 = sbr.rel (0) target = $region17
  $region16: #{autoencoder_forward.1} parent=0 // pred_region
    _
  $region17: #{autoencoder_forward.1} parent=0 // pred_fallthru
    _

</llo_original>
